<compile_context>
chip_gen: v7x
topology: tpu7x:2x2x1
jax: 0.10.0
libtpu: 0.0.40
codegen_flags: <defaults>
</compile_context>

<pallas_src>
import functools

import jax
import jax.numpy as jnp
from jax.experimental import pallas as pl
from jax.experimental.pallas import tpu as pltpu

LANE = 128  # TPU lane width; output is padded to a multiple of this.


def _forecast_kernel(tgt_ref, w1_ref, b1_ref, w2_ref, b2_ref, out_ref, *, seq_len):
    # past_observed_values == ones always (see wrapper), so masking and the
    # observed-count reduction are folded away.
    target = tgt_ref[...].astype(jnp.float32)                    # (TILE_B, T)

    # Mean-abs scaling over the time (lane) axis; T is a compile-time constant.
    abs_sum = jnp.sum(jnp.abs(target), axis=-1, keepdims=True)   # (TILE_B, 1)
    scale = jnp.maximum(abs_sum * (1.0 / seq_len), 1e-3)
    inv_scale = pl.reciprocal(scale, approx=True)                # EUP slot

    normed = target * inv_scale                                  # f32 elementwise

    # 2-layer MLP on the MXU: bf16 operands, f32 accumulation.
    h = jnp.dot(normed.astype(jnp.bfloat16), w1_ref[...],
                preferred_element_type=jnp.float32)
    h = jnp.maximum(h + b1_ref[...], 0.0)                        # (TILE_B, H), f32
    y = jnp.dot(h.astype(jnp.bfloat16), w2_ref[...],
                preferred_element_type=jnp.float32)
    y = y + b2_ref[...]                                          # (TILE_B, P_pad)

    # Rescale back to the data scale; lane-dense (P_pad = k*128) store.
    out_ref[...] = (y * scale).astype(out_ref.dtype)


def forecast_model_pallas(past_target, w1, b1, w2_pad, b2_pad, pred_len,
                          tile_b=8):
    """Synthetic forecast model: (B, T) -> (B, pred_len)."""
    B, T = past_target.shape
    H = w1.shape[1]
    P_pad = w2_pad.shape[1]                 # lane-dense (multiple of 128)
    tile_b = min(tile_b, B)                 # block dim: full B or multiple of 8
    grid = (pl.cdiv(B, tile_b),)

    kernel = functools.partial(_forecast_kernel, seq_len=T)
    out_padded = pl.pallas_call(
        kernel,
        out_shape=jax.ShapeDtypeStruct((B, P_pad), jnp.float32),
        grid=grid,
        in_specs=[
            # Activations: batch-tiled, double-buffered by the pipeliner.
            pl.BlockSpec((tile_b, T), lambda i: (i, 0)),
            # Weights / biases: constant index_map -> fetched once, VMEM-resident.
            pl.BlockSpec((T, H), lambda i: (0, 0)),
            pl.BlockSpec((1, H), lambda i: (0, 0)),
            pl.BlockSpec((H, P_pad), lambda i: (0, 0)),
            pl.BlockSpec((1, P_pad), lambda i: (0, 0)),
        ],
        out_specs=pl.BlockSpec((tile_b, P_pad), lambda i: (i, 0)),
        compiler_params=pltpu.CompilerParams(
            dimension_semantics=("parallel",),     # megacore-shard the batch axis
            vmem_limit_bytes=32 * 1024 * 1024),    # tiny tiles; well under v7x 64 MiB
    )(past_target, w1, b1, w2_pad, b2_pad)

    # Drop the lane padding outside the kernel.
    return out_padded[:, :pred_len]


def wrapped_forecast_forward(x, params, pred_len):
    """Equivalent of WrappedForecastModel.forward.

    x: (batch, seq_len, feat_dim=1) -> squeeze(-1) -> (batch, seq_len).
    past_observed_values = ones_like(past_target) is implied by the wrapper;
    since it is all-ones it is folded away inside the kernel (no extra DMA).
    """
    batch_size, seq_len, feat_dim = x.shape
    past_target = jnp.squeeze(x, axis=-1)                      # (B, T)
    w1, b1, w2_pad, b2_pad = params
    return forecast_model_pallas(past_target, w1, b1, w2_pad, b2_pad, pred_len)


def init_params(seq_len, hidden, pred_len, key):
    k1, k2 = jax.random.split(key)
    w1 = jax.random.normal(k1, (seq_len, hidden), jnp.float32) * (1.0 / seq_len ** 0.5)
    b1 = jnp.zeros((1, hidden), jnp.float32)
    w2 = jax.random.normal(k2, (hidden, pred_len), jnp.float32) * (1.0 / hidden ** 0.5)
    b2 = jnp.zeros((1, pred_len), jnp.float32)

    # Zero-pad the output projection to a lane-dense width (multiple of 128).
    p_pad = max(LANE, ((pred_len + LANE - 1) // LANE) * LANE)
    w2_pad = jnp.zeros((hidden, p_pad), jnp.float32).at[:, :pred_len].set(w2)
    b2_pad = jnp.zeros((1, p_pad), jnp.float32).at[:, :pred_len].set(b2)

    # bf16 matmul operands (f32 accumulate inside the kernel); biases stay f32.
    return w1.astype(jnp.bfloat16), b1, w2_pad.astype(jnp.bfloat16), b2_pad


if __name__ == "__main__":
    key = jax.random.PRNGKey(0)
    batch, seq_len, feat_dim = 16, 32, 1
    hidden, pred_len = 64, 16

    kx, kp = jax.random.split(key)
    x = jax.random.normal(kx, (batch, seq_len, feat_dim), jnp.float32)
    params = init_params(seq_len, hidden, pred_len, kp)

    out = wrapped_forecast_forward(x, params, pred_len)
    out = jax.block_until_ready(out)

    # Pure-JAX reference of the kernel semantics (same bf16 matmul operands,
    # exact reciprocal instead of the EUP approximation).
    tgt = jnp.squeeze(x, -1)
    obs = jnp.ones_like(tgt)                                   # as in the PyTorch wrapper
    masked = tgt * obs
    scale = jnp.maximum(
        jnp.sum(jnp.abs(masked), -1, keepdims=True)
        / jnp.maximum(jnp.sum(obs, -1, keepdims=True), 1.0), 1e-3)
    w1, b1, w2_pad, b2_pad = params
    h = jnp.maximum(
        jnp.dot((masked / scale).astype(jnp.bfloat16), w1,
                preferred_element_type=jnp.float32) + b1, 0.0)
    y = jnp.dot(h.astype(jnp.bfloat16), w2_pad,
                preferred_element_type=jnp.float32) + b2_pad
    ref = (y * scale)[:, :pred_len]

    assert out.shape == (batch, pred_len)
    assert jnp.allclose(out, ref, atol=2e-2, rtol=2e-2)

    print("KERNEL_OK")
</pallas_src>

<mosaic_0001>
module attributes {stable_mosaic.version = 11 : i64} {
  func.func @_forecast_kernel(%arg0: i32, %arg1: memref<8x32xf32, #tpu.memory_space<vmem>>, %arg2: memref<32x64xbf16, #tpu.memory_space<vmem>>, %arg3: memref<1x64xf32, #tpu.memory_space<vmem>>, %arg4: memref<64x128xbf16, #tpu.memory_space<vmem>>, %arg5: memref<1x128xf32, #tpu.memory_space<vmem>>, %arg6: memref<8x128xf32, #tpu.memory_space<vmem>>) attributes {dimension_semantics = [#tpu.dimension_semantics<parallel>], iteration_bounds = array<i64: 2>, scalar_prefetch = 0 : i64, scratch_operands = 0 : i64, tpu.core_type = #tpu.core_type<tc>, window_params = [{transform_indices = @transform_0, window_bounds = array<i64: 8, 32>}, {pipeline_mode = #tpu.pipeline_mode<synchronous>, transform_indices = @transform_1, window_bounds = array<i64: 32, 64>}, {pipeline_mode = #tpu.pipeline_mode<synchronous>, transform_indices = @transform_2, window_bounds = array<i64: 1, 64>}, {pipeline_mode = #tpu.pipeline_mode<synchronous>, transform_indices = @transform_3, window_bounds = array<i64: 64, 128>}, {pipeline_mode = #tpu.pipeline_mode<synchronous>, transform_indices = @transform_4, window_bounds = array<i64: 1, 128>}, {transform_indices = @transform_5, window_bounds = array<i64: 8, 128>}]} {
    %c0 = arith.constant 0 : index
    %c0_0 = arith.constant 0 : index
    %0 = vector.load %arg1[%c0, %c0_0] : memref<8x32xf32, #tpu.memory_space<vmem>>, vector<8x32xf32>
    %1 = math.absf %0 : vector<8x32xf32>
    %cst = arith.constant dense<0.000000e+00> : vector<8xf32>
    %2 = vector.multi_reduction <add>, %1, %cst [1] : vector<8x32xf32> to vector<8xf32>
    %3 = vector.shape_cast %2 : vector<8xf32> to vector<8x1xf32>
    %cst_1 = arith.constant 3.125000e-02 : f32
    %4 = vector.broadcast %cst_1 : f32 to vector<8x1xf32>
    %5 = arith.mulf %3, %4 : vector<8x1xf32>
    %cst_2 = arith.constant 1.000000e-03 : f32
    %6 = vector.broadcast %cst_2 : f32 to vector<8x1xf32>
    %7 = arith.maximumf %5, %6 : vector<8x1xf32>
    %8 = tpu.reciprocal %7 {approx = true} : vector<8x1xf32> -> vector<8x1xf32>
    %9 = vector.broadcast %8 : vector<8x1xf32> to vector<8x32xf32>
    %10 = arith.mulf %0, %9 : vector<8x32xf32>
    %11 = arith.truncf %10 : vector<8x32xf32> to vector<8x32xbf16>
    %c0_3 = arith.constant 0 : index
    %c0_4 = arith.constant 0 : index
    %12 = vector.load %arg2[%c0_3, %c0_4] : memref<32x64xbf16, #tpu.memory_space<vmem>>, vector<32x64xbf16>
    %cst_5 = arith.constant dense<0.000000e+00> : vector<8x64xf32>
    %13 = tpu.matmul %11, %12, %cst_5 {dimension_numbers = #tpu.dot_dimension_numbers<[1], [0], [0], [1], [0, 0, 1, 1], [], []>} : vector<8x32xbf16>, vector<32x64xbf16>, vector<8x64xf32> -> vector<8x64xf32>
    %c0_6 = arith.constant 0 : index
    %c0_7 = arith.constant 0 : index
    %14 = vector.load %arg3[%c0_6, %c0_7] : memref<1x64xf32, #tpu.memory_space<vmem>>, vector<1x64xf32>
    %15 = vector.broadcast %14 : vector<1x64xf32> to vector<8x64xf32>
    %16 = arith.addf %13, %15 : vector<8x64xf32>
    %cst_8 = arith.constant 0.000000e+00 : f32
    %17 = vector.broadcast %cst_8 : f32 to vector<8x64xf32>
    %18 = arith.maximumf %16, %17 : vector<8x64xf32>
    %19 = arith.truncf %18 : vector<8x64xf32> to vector<8x64xbf16>
    %c0_9 = arith.constant 0 : index
    %c0_10 = arith.constant 0 : index
    %20 = vector.load %arg4[%c0_9, %c0_10] : memref<64x128xbf16, #tpu.memory_space<vmem>>, vector<64x128xbf16>
    %cst_11 = arith.constant dense<0.000000e+00> : vector<8x128xf32>
    %21 = tpu.matmul %19, %20, %cst_11 {dimension_numbers = #tpu.dot_dimension_numbers<[1], [0], [0], [1], [0, 0, 1, 1], [], []>} : vector<8x64xbf16>, vector<64x128xbf16>, vector<8x128xf32> -> vector<8x128xf32>
    %c0_12 = arith.constant 0 : index
    %c0_13 = arith.constant 0 : index
    %22 = vector.load %arg5[%c0_12, %c0_13] : memref<1x128xf32, #tpu.memory_space<vmem>>, vector<1x128xf32>
    %23 = vector.broadcast %22 : vector<1x128xf32> to vector<8x128xf32>
    %24 = arith.addf %21, %23 : vector<8x128xf32>
    %25 = vector.broadcast %7 : vector<8x1xf32> to vector<8x128xf32>
    %26 = arith.mulf %24, %25 : vector<8x128xf32>
    %c0_14 = arith.constant 0 : index
    %c0_15 = arith.constant 0 : index
    %27 = vector.load %arg6[%c0_14, %c0_15] : memref<8x128xf32, #tpu.memory_space<vmem>>, vector<8x128xf32>
    tpu.vector_store %arg6[%c0_14, %c0_15], %26 {strides = array<i32>} : memref<8x128xf32, #tpu.memory_space<vmem>>, vector<8x128xf32>,
    return
  }
  func.func @transform_0(%arg0: i32) -> (i32, i32) {
    %c0_i32 = arith.constant 0 : i32
    %c0_i32_0 = arith.constant 0 : i32
    return %arg0, %c0_i32 : i32, i32
  }
  func.func @transform_1(%arg0: i32) -> (i32, i32) {
    %c0_i32 = arith.constant 0 : i32
    %c0_i32_0 = arith.constant 0 : i32
    %c0_i32_1 = arith.constant 0 : i32
    return %c0_i32, %c0_i32_0 : i32, i32
  }
  func.func @transform_2(%arg0: i32) -> (i32, i32) {
    %c0_i32 = arith.constant 0 : i32
    %c0_i32_0 = arith.constant 0 : i32
    %c0_i32_1 = arith.constant 0 : i32
    return %c0_i32, %c0_i32_0 : i32, i32
  }
  func.func @transform_3(%arg0: i32) -> (i32, i32) {
    %c0_i32 = arith.constant 0 : i32
    %c0_i32_0 = arith.constant 0 : i32
    %c0_i32_1 = arith.constant 0 : i32
    return %c0_i32, %c0_i32_0 : i32, i32
  }
  func.func @transform_4(%arg0: i32) -> (i32, i32) {
    %c0_i32 = arith.constant 0 : i32
    %c0_i32_0 = arith.constant 0 : i32
    %c0_i32_1 = arith.constant 0 : i32
    return %c0_i32, %c0_i32_0 : i32, i32
  }
  func.func @transform_5(%arg0: i32) -> (i32, i32) {
    %c0_i32 = arith.constant 0 : i32
    %c0_i32_0 = arith.constant 0 : i32
    return %arg0, %c0_i32 : i32, i32
  }
}

</mosaic_0001>

<llo_original>
// kernel: tpu_custom_call.1
$region0: #{tpu_custom_call.1}
  #allocation0 [shape = 'u32[]', space=smem, size = 0x4, offset = 0x4, fixed_abs, tag = 'smem constant byte address 0x4 - core index']
  #allocation1 [shape = 'u32[144,128]{1,0:T(1,128)}', space=vmem, size = 0x12000, scoped, tag = 'internal scratch']
  %s0 = inlined_call_operand.hbm [shape: f32[16,32], index: 0, kind: input, shape index: {}]
  %s1 = inlined_call_operand.hbm [shape: bf16[32,64], index: 1, kind: input, shape index: {}]
  %s2 = inlined_call_operand.vmem [shape: f32[1,64], index: 2, kind: input, shape index: {}]
  %s3 = inlined_call_operand.hbm [shape: bf16[64,128], index: 3, kind: input, shape index: {}]
  %s4 = inlined_call_operand.vmem [shape: f32[1,128], index: 4, kind: input, shape index: {}]
  %s5 = inlined_call_operand.hbm [shape: f32[16,128], index: 5, kind: output, shape index: {}]
  %s6 = sld [smem:[#allocation0]]
  $region65: #{tpu_custom_call.1} parent=0
    _
  %s8 = ssub.s32 1, %s6
  %s9 = scalar_select 0, %s8, %s6
  $region1: #{tpu_custom_call.1} parent=0
    #allocation2 [shape = 'u8[8192]{0}', space=vmem, size = 0x2000, scoped, tag = 'input window, operand 0']
    #allocation3 [shape = 's32[2]{0}', space=sflag, size = 0x8, scoped, tag = 'scoped memory for tpu_custom_call.1']
    #allocation4 [shape = 's32[2]{0}', space=sflag, size = 0x8, scoped, tag = 'scoped memory for tpu_custom_call.1']
    #allocation5 [shape = 'u8[8192]{0}', space=vmem, size = 0x2000, scoped, tag = 'input window, operand 1, single buffered']
    #allocation6 [shape = 's32[1]{0}', space=sflag, size = 0x4, scoped, tag = 'scoped memory for tpu_custom_call.1']
    #allocation7 [shape = 'u8[16384]{0}', space=vmem, size = 0x4000, scoped, tag = 'input window, operand 3, single buffered']
    #allocation8 [shape = 'u8[8192]{0}', space=vmem, size = 0x2000, scoped, tag = 'output window, operand 0']
    %10 = vsyncpa [#allocation3], 0
    %s11 = scalar_lea.sflag [#allocation3], 1
    %12 = vsyncpa %s11, 0
    %13 = vsyncpa [#allocation6], 0
    %14 = vsyncpa [#allocation4], 0
    %s15 = scalar_lea.sflag [#allocation4], 1
    %16 = vsyncpa %s15, 0
    loop: start=0, step=1, limit=4
    $region2: #{tpu_custom_call.1} parent=1 // loop_pre_header
      _
    $region3: #{tpu_custom_call.1} parent=1 // loop_header
      %s18 = sphi 0, %s22
      %p19 = scmp.ge.s32.totalorder %s18, 4
      %s28 = sphi 0, %s30
      %s31 = sphi 0, %s28
      %s32 = sphi 0, %s31
      %s48 = sphi 0, %s32
      %s52 = sphi 0, %s52
      %s54 = sphi 0, %s52
      %s55 = sphi 0, %s54
      %s69 = sphi 0, %s55
      %s73 = sphi 0, %s73
      %s75 = sphi 0, %s73
      %s76 = sphi 0, %s75
      %s90 = sphi 0, %s76
      %s94 = sphi 0, %s94
      %s96 = sphi 0, %s94
      %s97 = sphi 0, %s96
      %s111 = sphi 0, %s97
      %s115 = sphi 0, %s115
      %s117 = sphi 0, %s115
      %s118 = sphi 0, %s117
      %s132 = sphi 0, %s118
      %s138 = sphi 0, %s140
      %s141 = sphi 0, %s138
      %s142 = sphi 0, %s141
      %s158 = sphi 0, %s142
    $region4: #{tpu_custom_call.1} parent=1 // loop_header_branch
      %21 = sbr.rel (%p19) target = $region8
    $region5: #{tpu_custom_call.1} parent=1 // loop_body
      %s23 = ssub.s32 %s18, 1
      %s24 = ssub.s32 %s18, 2
      %s25 = sadd.s32 %s18, 1
      %s26 = ssub.s32 %s18, %s25
      %p27 = scmp.eq.s32.totalorder %s26, 0
      %s29 = sadd.s32 %s28, 1
      %s30 = scalar_select %p27, %s28, %s29
      %p33 = pneg %p27
      %p34 = scmp.eq.s32.totalorder %s18, 1
      %p35 = por %p33, %p34
      %p36 = scmp.ne.s32.totalorder %s28, %s31
      %p37 = scmp.eq.s32.totalorder %s18, 0
      %p38 = por %p36, %p37
      %p39 = scmp.ne.s32.totalorder %s28, %s31
      %p40 = scmp.eq.s32.totalorder %s23, 1
      %p41 = por %p39, %p40
      %p42 = scmp.ne.s32.totalorder %s31, %s32
      %p43 = scmp.eq.s32.totalorder %s23, 0
      %p44 = por %p42, %p43
      %p45 = scmp.ne.s32.totalorder %s31, %s32
      %p46 = scmp.eq.s32.totalorder %s24, 1
      %p47 = por %p45, %p46
      %p49 = scmp.ne.s32.totalorder %s32, %s48
      %p50 = scmp.eq.s32.totalorder %s24, 0
      %p51 = por %p49, %p50
      %s53 = sadd.s32 %s52, 1
      %p56 = scmp.eq.s32.totalorder %s18, 1
      %p57 = scmp.ne.s32.totalorder %s52, %s54
      %p58 = scmp.eq.s32.totalorder %s18, 0
      %p59 = por %p57, %p58
      %p60 = scmp.ne.s32.totalorder %s52, %s54
      %p61 = scmp.eq.s32.totalorder %s23, 1
      %p62 = por %p60, %p61
      %p63 = scmp.ne.s32.totalorder %s54, %s55
      %p64 = scmp.eq.s32.totalorder %s23, 0
      %p65 = por %p63, %p64
      %p66 = scmp.ne.s32.totalorder %s54, %s55
      %p67 = scmp.eq.s32.totalorder %s24, 1
      %p68 = por %p66, %p67
      %p70 = scmp.ne.s32.totalorder %s55, %s69
      %p71 = scmp.eq.s32.totalorder %s24, 0
      %p72 = por %p70, %p71
      %s74 = sadd.s32 %s73, 1
      %p77 = scmp.eq.s32.totalorder %s18, 1
      %p78 = scmp.ne.s32.totalorder %s73, %s75
      %p79 = scmp.eq.s32.totalorder %s18, 0
      %p80 = por %p78, %p79
      %p81 = scmp.ne.s32.totalorder %s73, %s75
      %p82 = scmp.eq.s32.totalorder %s23, 1
      %p83 = por %p81, %p82
      %p84 = scmp.ne.s32.totalorder %s75, %s76
      %p85 = scmp.eq.s32.totalorder %s23, 0
      %p86 = por %p84, %p85
      %p87 = scmp.ne.s32.totalorder %s75, %s76
      %p88 = scmp.eq.s32.totalorder %s24, 1
      %p89 = por %p87, %p88
      %p91 = scmp.ne.s32.totalorder %s76, %s90
      %p92 = scmp.eq.s32.totalorder %s24, 0
      %p93 = por %p91, %p92
      %s95 = sadd.s32 %s94, 1
      %p98 = scmp.eq.s32.totalorder %s18, 1
      %p99 = scmp.ne.s32.totalorder %s94, %s96
      %p100 = scmp.eq.s32.totalorder %s18, 0
      %p101 = por %p99, %p100
      %p102 = scmp.ne.s32.totalorder %s94, %s96
      %p103 = scmp.eq.s32.totalorder %s23, 1
      %p104 = por %p102, %p103
      %p105 = scmp.ne.s32.totalorder %s96, %s97
      %p106 = scmp.eq.s32.totalorder %s23, 0
      %p107 = por %p105, %p106
      %p108 = scmp.ne.s32.totalorder %s96, %s97
      %p109 = scmp.eq.s32.totalorder %s24, 1
      %p110 = por %p108, %p109
      %p112 = scmp.ne.s32.totalorder %s97, %s111
      %p113 = scmp.eq.s32.totalorder %s24, 0
      %p114 = por %p112, %p113
      %s116 = sadd.s32 %s115, 1
      %p119 = scmp.eq.s32.totalorder %s18, 1
      %p120 = scmp.ne.s32.totalorder %s115, %s117
      %p121 = scmp.eq.s32.totalorder %s18, 0
      %p122 = por %p120, %p121
      %p123 = scmp.ne.s32.totalorder %s115, %s117
      %p124 = scmp.eq.s32.totalorder %s23, 1
      %p125 = por %p123, %p124
      %p126 = scmp.ne.s32.totalorder %s117, %s118
      %p127 = scmp.eq.s32.totalorder %s23, 0
      %p128 = por %p126, %p127
      %p129 = scmp.ne.s32.totalorder %s117, %s118
      %p130 = scmp.eq.s32.totalorder %s24, 1
      %p131 = por %p129, %p130
      %p133 = scmp.ne.s32.totalorder %s118, %s132
      %p134 = scmp.eq.s32.totalorder %s24, 0
      %p135 = por %p133, %p134
      %s136 = ssub.s32 %s18, %s25
      %p137 = scmp.eq.s32.totalorder %s136, 0
      %s139 = sadd.s32 %s138, 1
      %s140 = scalar_select %p137, %s138, %s139
      %p143 = pneg %p137
      %p144 = scmp.eq.s32.totalorder %s18, 1
      %p145 = por %p143, %p144
      %p146 = scmp.ne.s32.totalorder %s138, %s141
      %p147 = scmp.eq.s32.totalorder %s18, 0
      %p148 = por %p146, %p147
      %p149 = scmp.ne.s32.totalorder %s138, %s141
      %p150 = scmp.eq.s32.totalorder %s23, 1
      %p151 = por %p149, %p150
      %p152 = scmp.ne.s32.totalorder %s141, %s142
      %p153 = scmp.eq.s32.totalorder %s23, 0
      %p154 = por %p152, %p153
      %p155 = scmp.ne.s32.totalorder %s141, %s142
      %p156 = scmp.eq.s32.totalorder %s24, 1
      %p157 = por %p155, %p156
      %p159 = scmp.ne.s32.totalorder %s142, %s158
      %p160 = scmp.eq.s32.totalorder %s24, 0
      %p161 = por %p159, %p160
      %p162 = scmp.le.s32.totalorder 1, %s18
      %p163 = scmp.lt.s32.totalorder %s18, 3
      %p164 = pnand %p162, %p163
      %p165 = pneg %p164
      // Predicated region
      $region9: #{tpu_custom_call.1} parent=5 // pred_check
        _
      $region10: #{tpu_custom_call.1} parent=5 // pred_check_branch
        %167 = sbr.rel (%p164) target = $region12
      $region11: #{tpu_custom_call.1} parent=5 // pred_region
        %s168 = ssub.s32 %s18, 1
        // Predicated region
        $region13: #{tpu_custom_call.1} parent=11 // pred_check
          %p169 = pneg %p65
        $region14: #{tpu_custom_call.1} parent=11 // pred_check_branch
          %171 = sbr.rel (%p169) target = $region16
        $region15: #{tpu_custom_call.1} parent=11 // pred_region
          %s173 = ssub.s32 256, 256
          %174 = vsyncadd [#allocation6], %s173
          %s175 = sshll.u32 [#allocation5], 4
          %s176 = int_to_ptr.vmem [resolvable:$true] %s175
          %181 = dma.hbm_to_vmem [thread:$0]  %s1, 256, %s176, [#allocation6], 64, 64, 4
        $region16: #{tpu_custom_call.1} parent=11 // pred_fallthru
          _
        // Predicated region
        $region17: #{tpu_custom_call.1} parent=11 // pred_check
          %p182 = pneg %p86
        $region18: #{tpu_custom_call.1} parent=11 // pred_check_branch
          %184 = sbr.rel (%p182) target = $region20
        $region19: #{tpu_custom_call.1} parent=11 // pred_region
          _
        $region20: #{tpu_custom_call.1} parent=11 // pred_fallthru
          _
        // Predicated region
        $region21: #{tpu_custom_call.1} parent=11 // pred_check
          %p185 = pneg %p107
        $region22: #{tpu_custom_call.1} parent=11 // pred_check_branch
          %187 = sbr.rel (%p185) target = $region24
        $region23: #{tpu_custom_call.1} parent=11 // pred_region
          %s189 = ssub.s32 512, 512
          %190 = vsyncadd [#allocation6], %s189
          %s191 = sshll.u32 [#allocation7], 4
          %s192 = int_to_ptr.vmem [resolvable:$true] %s191
          %197 = dma.hbm_to_vmem [thread:$0]  %s3, 512, %s192, [#allocation6], 64, 64, 4
        $region24: #{tpu_custom_call.1} parent=11 // pred_fallthru
          _
        // Predicated region
        $region25: #{tpu_custom_call.1} parent=11 // pred_check
          %p198 = pneg %p128
        $region26: #{tpu_custom_call.1} parent=11 // pred_check_branch
          %200 = sbr.rel (%p198) target = $region28
        $region27: #{tpu_custom_call.1} parent=11 // pred_region
          _
        $region28: #{tpu_custom_call.1} parent=11 // pred_fallthru
          _
      $region12: #{tpu_custom_call.1} parent=5 // pred_fallthru
        _
      %p201 = scmp.lt.s32.totalorder %s18, 2
      // Predicated region
      $region29: #{tpu_custom_call.1} parent=5 // pred_check
        %p202 = pneg %p201
      $region30: #{tpu_custom_call.1} parent=5 // pred_check_branch
        %204 = sbr.rel (%p202) target = $region32
      $region31: #{tpu_custom_call.1} parent=5 // pred_region
        // Predicated region
        $region33: #{tpu_custom_call.1} parent=31 // pred_check
          %p205 = pneg %p38
        $region34: #{tpu_custom_call.1} parent=31 // pred_check_branch
          %207 = sbr.rel (%p205) target = $region36
        $region35: #{tpu_custom_call.1} parent=31 // pred_region
          %s208 = sand.u32 %s28, 1
          %s209 = scalar_lea.sflag [#allocation3], %s208
          %s210 = sand.u32 %s28, 1
          %s211 = smul.addr %s210, 8
          %s212 = scalar_lea.vmem [#allocation2], %s211
          %s214 = ssub.s32 128, 128
          %215 = vsyncadd %s209, %s214
          %s216 = smul.addr %s18, 128
          %s217 = scalar_lea.hbm %s0, %s216
          %s219 = sshll.u32 %s212, 4
          %s220 = int_to_ptr.vmem [resolvable:$true] %s219
          %222 = dma.hbm_to_vmem [thread:$0]  %s217, 128, %s220, %s209
        $region36: #{tpu_custom_call.1} parent=31 // pred_fallthru
          _
      $region32: #{tpu_custom_call.1} parent=5 // pred_fallthru
        _
      %p223 = scmp.le.s32.totalorder 1, %s18
      %p224 = scmp.lt.s32.totalorder %s18, 3
      %p225 = pnand %p223, %p224
      %p226 = pneg %p225
      // Predicated region
      $region37: #{tpu_custom_call.1} parent=5 // pred_check
        _
      $region38: #{tpu_custom_call.1} parent=5 // pred_check_branch
        %228 = sbr.rel (%p225) target = $region40
      $region39: #{tpu_custom_call.1} parent=5 // pred_region
        %s229 = ssub.s32 %s18, 1
        %s230 = sand.u32 %s31, 1
        %s231 = scalar_lea.sflag [#allocation3], %s230
        %s232 = sand.u32 %s31, 1
        %s233 = smul.addr %s232, 8
        %s234 = scalar_lea.vmem [#allocation2], %s233
        // Predicated region
        $region41: #{tpu_custom_call.1} parent=39 // pred_check
          %p235 = pneg %p44
        $region42: #{tpu_custom_call.1} parent=39 // pred_check_branch
          %237 = sbr.rel (%p235) target = $region44
        $region43: #{tpu_custom_call.1} parent=39 // pred_region
          %238 = dma.done %s231, 128
        $region44: #{tpu_custom_call.1} parent=39 // pred_fallthru
          _
        // Predicated region
        $region45: #{tpu_custom_call.1} parent=39 // pred_check
          %p239 = pneg %p65
        $region46: #{tpu_custom_call.1} parent=39 // pred_check_branch
          %241 = sbr.rel (%p239) target = $region48
        $region47: #{tpu_custom_call.1} parent=39 // pred_region
          %242 = dma.done [#allocation6], 256
        $region48: #{tpu_custom_call.1} parent=39 // pred_fallthru
          _
        // Predicated region
        $region49: #{tpu_custom_call.1} parent=39 // pred_check
          %p243 = pneg %p107
        $region50: #{tpu_custom_call.1} parent=39 // pred_check_branch
          %245 = sbr.rel (%p243) target = $region52
        $region51: #{tpu_custom_call.1} parent=39 // pred_region
          %246 = dma.done [#allocation6], 512
        $region52: #{tpu_custom_call.1} parent=39 // pred_fallthru
          _
        %s247 = sand.u32 %s31, 1
        %s248 = scalar_lea.sflag [#allocation3], %s247
        %s249 = sand.u32 %s31, 1
        %s250 = smul.addr %s249, 8
        %s251 = scalar_lea.vmem [#allocation2], %s250
        %p252 = pneg %p44
        %p253 = pneg %p41
        %p254 = pneg %p65
        %p255 = pneg %p62
        %p256 = pneg %p86
        %p257 = pneg %p83
        %p258 = pneg %p107
        %p259 = pneg %p104
        %p260 = pneg %p128
        %p261 = pneg %p125
        %p262 = pneg %p154
        %p263 = pneg %p151
        %s264 = sand.u32 %s141, 1
        %s265 = scalar_lea.sflag [#allocation4], %s264
        %s266 = sand.u32 %s141, 1
        %s267 = smul.addr %s266, 8
        %s268 = scalar_lea.vmem [#allocation8], %s267
        %v270 = vld [vmem:[%s234] sm:$0xff]
        %v271 = vand.u32 2147483647, %v270
        %vm272 = vcmask 261120
        %v273 = vsel %vm272, %v271, 0.0
        %274 = vadd.xlane.f32.xlu0 %v273
        %v275 = vpop.xlane.xlu0 %274
        %v276 = vmul.f32 %v275, 0.03125
        %v277 = vmax.f32 %v276, 0.001
        %v278 = vrcp.pop %v277
        %v279 = vmul.f32 %v270, %v278
        %v280 = vpack.c.bf16 %v279, %v279
        %v281 = vld [vmem:[#allocation5] sm:$0xf]
        %v282 = vld [vmem:[#allocation5 + $0x4] sm:$0xf]
        %v283 = vld [vmem:[#allocation5 + $0x8] sm:$0xf]
        %v284 = vld [vmem:[#allocation5 + $0xc] sm:$0xf]
        %v285 = vld [vmem:[%s2] sm:$0x1]
        %v287 = vlaneseq
        %v288 = vshrl.u32 %v287, 7
        %v289 = vsub.s32 0, %v288
        %v290 = vrot.slane %v285, %v289
        %v296 = vunpack.c.l.b16 %v281
        %v297 = vunpack.c.l.b16 %v282
        %v298 = vunpack.c.l.b16 %v283
        %v299 = vunpack.c.l.b16 %v284
        %v300 = vpack.c.b16 %v297, %v296
        %v301 = vpack.c.b16 %v299, %v298
        %v305 = vsel %vm272, %v280, 0
        %307 = vmatprep.subr.bf16.mxu0 0
        %308 = vmatpush1.bf16.msra.mxu0 %v300
        %309 = vmatprep.subr.bf16.mxu0 0
        %310 = vmatpush1.bf16.msra.mxu0 %v301
        %311 = vmatprep.subr.bf16.mxu0 0
        %312 = vmatpush1.bf16.msra.mxu0 0
        %313 = vmatprep.subr.bf16.mxu0 0
        %314 = vmatpush1.bf16.msra.mxu0 0
        %315 = vmatprep.subr.bf16.mxu0 0
        %316 = vmatpush1.bf16.msra.mxu0 0
        %317 = vmatprep.subr.bf16.mxu0 0
        %318 = vmatpush1.bf16.msra.mxu0 0
        %319 = vmatprep.subr.bf16.mxu0 0
        %320 = vmatpush1.bf16.msra.mxu0 0
        %321 = vmatprep.subr.bf16.mxu0 0
        %322 = vmatpush1.bf16.msra.mxu0 0
        %323 = vmatprep.subr.bf16.mxu0 0
        %324 = vmatpush1.bf16.msra.mxu0 0
        %325 = vmatprep.subr.bf16.mxu0 0
        %326 = vmatpush1.bf16.msra.mxu0 0
        %327 = vmatprep.subr.bf16.mxu0 0
        %328 = vmatpush1.bf16.msra.mxu0 0
        %329 = vmatprep.subr.bf16.mxu0 0
        %330 = vmatpush1.bf16.msra.mxu0 0
        %331 = vmatprep.subr.bf16.mxu0 0
        %332 = vmatpush1.bf16.msra.mxu0 0
        %333 = vmatprep.subr.bf16.mxu0 0
        %334 = vmatpush1.bf16.msra.mxu0 0
        %335 = vmatprep.subr.bf16.mxu0 0
        %336 = vmatpush1.bf16.msra.mxu0 0
        %337 = vmatprep.subr.bf16.mxu0 0
        %338 = vmatpush1.bf16.msra.mxu0 0
        %339 = vmatprep.mubr.bf16.mxu0 0
        %340 = vmatmul.mubr.bf16.gmra.mrb[0].mxu0 %v305
        %v341 = vpop.f32.mrb[0].mxu0
        %v342 = vadd.f32 %v290, %v341
        %v343 = vpop.f32.mrb[0].mxu0
        %v344 = vpop.f32.mrb[0].mxu0
        %v345 = vpop.f32.mrb[0].mxu0
        %346 = vdwg.mxu0
        %v347 = vmax.f32 %v342, 0.0
        %v348 = vpack.c.bf16 %v347, %v347
        %v349 = vld [vmem:[#allocation7] sm:$0xf]
        %v350 = vld [vmem:[#allocation7 + $0x4] sm:$0xf]
        %v351 = vld [vmem:[#allocation7 + $0x8] sm:$0xf]
        %v352 = vld [vmem:[#allocation7 + $0xc] sm:$0xf]
        %v353 = vld [vmem:[#allocation7 + $0x10] sm:$0xf]
        %v354 = vld [vmem:[#allocation7 + $0x14] sm:$0xf]
        %v355 = vld [vmem:[#allocation7 + $0x18] sm:$0xf]
        %v356 = vld [vmem:[#allocation7 + $0x1c] sm:$0xf]
        %v357 = vld [vmem:[%s4] sm:$0x1]
        %v359 = vlaneseq
        %v360 = vshrl.u32 %v359, 7
        %v361 = vsub.s32 0, %v360
        %v362 = vrot.slane %v357, %v361
        %v372 = vunpack.c.l.b16 %v349
        %v373 = vunpack.c.l.b16 %v350
        %v374 = vunpack.c.l.b16 %v351
        %v375 = vunpack.c.l.b16 %v352
        %v376 = vunpack.c.l.b16 %v353
        %v377 = vunpack.c.l.b16 %v354
        %v378 = vunpack.c.l.b16 %v355
        %v379 = vunpack.c.l.b16 %v356
        %v380 = vpack.c.b16 %v373, %v372
        %v381 = vpack.c.b16 %v375, %v374
        %v382 = vpack.c.b16 %v377, %v376
        %v383 = vpack.c.b16 %v379, %v378
        %vm388 = vcmask 523264
        %v390 = vsel %vm388, %v348, 0
        %392 = vmatprep.subr.bf16.mxu0 0
        %393 = vmatpush1.bf16.msra.mxu0 %v380
        %394 = vmatprep.subr.bf16.mxu0 0
        %395 = vmatpush1.bf16.msra.mxu0 %v381
        %396 = vmatprep.subr.bf16.mxu0 0
        %397 = vmatpush1.bf16.msra.mxu0 %v382
        %398 = vmatprep.subr.bf16.mxu0 0
        %399 = vmatpush1.bf16.msra.mxu0 %v383
        %400 = vmatprep.subr.bf16.mxu0 0
        %401 = vmatpush1.bf16.msra.mxu0 0
        %402 = vmatprep.subr.bf16.mxu0 0
        %403 = vmatpush1.bf16.msra.mxu0 0
        %404 = vmatprep.subr.bf16.mxu0 0
        %405 = vmatpush1.bf16.msra.mxu0 0
        %406 = vmatprep.subr.bf16.mxu0 0
        %407 = vmatpush1.bf16.msra.mxu0 0
        %408 = vmatprep.subr.bf16.mxu0 0
        %409 = vmatpush1.bf16.msra.mxu0 0
        %410 = vmatprep.subr.bf16.mxu0 0
        %411 = vmatpush1.bf16.msra.mxu0 0
        %412 = vmatprep.subr.bf16.mxu0 0
        %413 = vmatpush1.bf16.msra.mxu0 0
        %414 = vmatprep.subr.bf16.mxu0 0
        %415 = vmatpush1.bf16.msra.mxu0 0
        %416 = vmatprep.subr.bf16.mxu0 0
        %417 = vmatpush1.bf16.msra.mxu0 0
        %418 = vmatprep.subr.bf16.mxu0 0
        %419 = vmatpush1.bf16.msra.mxu0 0
        %420 = vmatprep.subr.bf16.mxu0 0
        %421 = vmatpush1.bf16.msra.mxu0 0
        %422 = vmatprep.subr.bf16.mxu0 0
        %423 = vmatpush1.bf16.msra.mxu0 0
        %424 = vmatprep.mubr.bf16.mxu0 0
        %425 = vmatmul.mubr.bf16.gmra.mrb[0].mxu0 %v390
        %v426 = vpop.f32.mrb[0].mxu0
        %v427 = vadd.f32 %v362, %v426
        %v428 = vpop.f32.mrb[0].mxu0
        %v429 = vpop.f32.mrb[0].mxu0
        %v430 = vpop.f32.mrb[0].mxu0
        %431 = vdwg.mxu0
        %v432 = vmul.f32 %v427, %v277
        %433 = vst [vmem:[%s268] sm:$0xff] %v432
        %s434 = sand.u32 %s141, 1
        %s435 = scalar_lea.sflag [#allocation4], %s434
        %s436 = sand.u32 %s141, 1
        %s437 = smul.addr %s436, 8
        %s438 = scalar_lea.vmem [#allocation8], %s437
        // Predicated region
        $region53: #{tpu_custom_call.1} parent=39 // pred_check
          %p439 = pneg %p151
        $region54: #{tpu_custom_call.1} parent=39 // pred_check_branch
          %441 = sbr.rel (%p439) target = $region56
        $region55: #{tpu_custom_call.1} parent=39 // pred_region
          %s443 = ssub.s32 128, 128
          %444 = vsyncadd %s435, %s443
          %s445 = smul.addr %s23, 128
          %s446 = scalar_lea.hbm %s5, %s445
          %s448 = sshll.u32 %s438, 4
          %s449 = int_to_ptr.vmem [resolvable:$true] %s448
          %451 = dma.vmem_to_hbm [thread:$0]  %s449, 128, %s446, %s435
        $region56: #{tpu_custom_call.1} parent=39 // pred_fallthru
          _
      $region40: #{tpu_custom_call.1} parent=5 // pred_fallthru
        _
      %p452 = scmp.le.s32.totalorder 2, %s18
      // Predicated region
      $region57: #{tpu_custom_call.1} parent=5 // pred_check
        %p453 = pneg %p452
      $region58: #{tpu_custom_call.1} parent=5 // pred_check_branch
        %455 = sbr.rel (%p453) target = $region60
      $region59: #{tpu_custom_call.1} parent=5 // pred_region
        %s456 = ssub.s32 %s18, 2
        // Predicated region
        $region61: #{tpu_custom_call.1} parent=59 // pred_check
          %p457 = pneg %p157
        $region62: #{tpu_custom_call.1} parent=59 // pred_check_branch
          %459 = sbr.rel (%p457) target = $region64
        $region63: #{tpu_custom_call.1} parent=59 // pred_region
          %s460 = sand.u32 %s142, 1
          %s461 = scalar_lea.sflag [#allocation4], %s460
          %s462 = sand.u32 %s142, 1
          %s463 = smul.addr %s462, 8
          %s464 = scalar_lea.vmem [#allocation8], %s463
          %465 = dma.done %s461, 128
        $region64: #{tpu_custom_call.1} parent=59 // pred_fallthru
          _
      $region60: #{tpu_custom_call.1} parent=5 // pred_fallthru
        _
    $region6: #{tpu_custom_call.1} parent=1 // loop_footer
      %s22 = sadd.s32 1, %s18
    $region7: #{tpu_custom_call.1} parent=1 // loop_footer_branch
      %17 = sbr.rel target = $region3
    $region8: #{tpu_custom_call.1} parent=1 // loop_exit
      _
    %466 = vsyncpa [#allocation3], 1
    %s467 = scalar_lea.sflag [#allocation3], 1
    %468 = vsyncpa %s467, 1
    %469 = vsyncpa [#allocation6], 1
    %470 = vsyncpa [#allocation4], 1
    %s471 = scalar_lea.sflag [#allocation4], 1
    %472 = vsyncpa %s471, 1

</llo_original>
